<compile_context>
chip_gen: v7x
topology: tpu7x:2x2x1
jax: 0.10.0
libtpu: 0.0.40
codegen_flags: <defaults>
</compile_context>

<pallas_src>
import jax
import jax.numpy as jnp
from jax.experimental import pallas as pl
from jax.experimental.pallas import tpu as pltpu

H1, H2, OUT = 128, 64, 11
OUT_PAD = 128  # lane-dense output block (11 -> 128), sliced off in the wrapper


def _round_up(x, m):
    return (x + m - 1) // m * m


def _mlp_kernel(x_ref, w1_ref, b1_ref, w2_ref, b2_ref, w3_ref, b3_ref, o_ref):
    # fc1 + ReLU (bf16 operands, f32 accumulation on the MXU)
    h = jnp.dot(x_ref[...], w1_ref[...], preferred_element_type=jnp.float32)
    h = jnp.maximum(h + b1_ref[...], 0.0).astype(jnp.bfloat16)
    # fc2 + ReLU
    h = jnp.dot(h, w2_ref[...], preferred_element_type=jnp.float32)
    h = jnp.maximum(h + b2_ref[...], 0.0).astype(jnp.bfloat16)
    # fc3 (bias add folded into the store; zero-padded columns 11..127)
    o_ref[...] = (jnp.dot(h, w3_ref[...], preferred_element_type=jnp.float32)
                  + b3_ref[...]).astype(o_ref.dtype)


def downstream_three_layer_classifier(x, params, *, block_b=512):
    """x: (B, 1, D) float32 -> (B, 11) float32 (matches PyTorch squeeze(1))."""
    B, one, D = x.shape
    assert one == 1, "expected encoder output of shape (B, 1, input_depth)"
    x2d = x.reshape(B, D)

    # Batch tiling: at least one sublane (8 rows), at most `block_b` rows/step.
    TB = min(block_b, _round_up(B, 8))
    B_pad = _round_up(B, TB)
    nb = B_pad // TB

    # Pad batch rows, cast activations/weights to bf16, pad fc3 to 128 lanes.
    x_p = jnp.pad(x2d, ((0, B_pad - B), (0, 0))).astype(jnp.bfloat16)
    w1 = params["w1"].astype(jnp.bfloat16)
    b1 = params["b1"].astype(jnp.float32)
    w2 = params["w2"].astype(jnp.bfloat16)
    b2 = params["b2"].astype(jnp.float32)
    w3 = jnp.zeros((H2, OUT_PAD), jnp.bfloat16).at[:, :OUT].set(
        params["w3"].astype(jnp.bfloat16))
    b3 = jnp.zeros((1, OUT_PAD), jnp.float32).at[:, :OUT].set(
        params["b3"].astype(jnp.float32))

    # Advisory cost estimate for XLA's scheduler.
    flops = 2 * B_pad * (D * H1 + H1 * H2 + H2 * OUT_PAD)
    bytes_accessed = (x_p.size * 2                       # bf16 activations in
                      + (w1.size + w2.size + w3.size) * 2
                      + (b1.size + b2.size + b3.size) * 4
                      + B_pad * OUT_PAD * 4)             # f32 out

    # Actual VMEM working set (+ headroom) instead of a blanket 64 MiB cap.
    vmem_bytes = (2 * TB * D * 2                         # double-buffered x tile
                  + 2 * TB * OUT_PAD * 4                 # double-buffered out tile
                  + 2 * (D * H1 + H1 * H2 + H2 * OUT_PAD) * 2   # resident weights
                  + 2 * (H1 + H2 + OUT_PAD) * 4                 # resident biases
                  + 4 * TB * H1 * 4                      # live f32 intermediates
                  + (8 << 20))                           # compiler scratch headroom

    const = lambda i: (0, 0)   # weights/biases stay put across grid steps
    out = pl.pallas_call(
        _mlp_kernel,
        out_shape=jax.ShapeDtypeStruct((B_pad, OUT_PAD), jnp.float32),
        grid=(nb,),
        in_specs=[
            pl.BlockSpec((TB, D), lambda i: (i, 0)),
            pl.BlockSpec((D, H1), const), pl.BlockSpec((1, H1), const),
            pl.BlockSpec((H1, H2), const), pl.BlockSpec((1, H2), const),
            pl.BlockSpec((H2, OUT_PAD), const), pl.BlockSpec((1, OUT_PAD), const),
        ],
        out_specs=pl.BlockSpec((TB, OUT_PAD), lambda i: (i, 0)),
        compiler_params=pltpu.CompilerParams(
            dimension_semantics=("parallel",),
            vmem_limit_bytes=int(vmem_bytes)),
        cost_estimate=pl.CostEstimate(
            flops=flops, transcendentals=0, bytes_accessed=bytes_accessed),
    )(x_p, w1, b1, w2, b2, w3, b3)

    return out[:B, :OUT]


def init_params(key, input_depth):
    """nn.Linear-style init; weights stored (in, out) for x @ W."""
    dims = [(input_depth, H1), (H1, H2), (H2, OUT)]
    keys = jax.random.split(key, 2 * len(dims))
    params = {}
    for i, (fan_in, fan_out) in enumerate(dims):
        bound = 1.0 / jnp.sqrt(fan_in)
        params[f"w{i+1}"] = jax.random.uniform(
            keys[2 * i], (fan_in, fan_out), jnp.float32, -bound, bound)
        params[f"b{i+1}"] = jax.random.uniform(
            keys[2 * i + 1], (1, fan_out), jnp.float32, -bound, bound)
    return params


def _reference(x, params):
    h = x.reshape(x.shape[0], -1).astype(jnp.float32)
    h = jnp.maximum(h @ params["w1"] + params["b1"], 0.0)
    h = jnp.maximum(h @ params["w2"] + params["b2"], 0.0)
    return h @ params["w3"] + params["b3"]


if __name__ == "__main__":
    INPUT_DEPTH = 1024

    key = jax.random.PRNGKey(0)
    kx, kp, kx2 = jax.random.split(key, 3)
    params = init_params(kp, INPUT_DEPTH)

    # Case 1: small batch (B=2), matches the module's typical usage.
    x = jax.random.normal(kx, (2, 1, INPUT_DEPTH), dtype=jnp.float32)
    out = jax.block_until_ready(downstream_three_layer_classifier(x, params))
    ref = _reference(x, params)
    assert out.shape == (2, OUT), out.shape
    # bf16 matmul operands with f32 accumulation -> loosened tolerance.
    assert jnp.allclose(out, ref, atol=2e-2, rtol=2e-2), "mismatch vs reference (B=2)"

    # Case 2: larger batch exercising multi-step grid (nb=2) + row padding.
    x_big = jax.random.normal(kx2, (520, 1, INPUT_DEPTH), dtype=jnp.float32)
    out_big = jax.block_until_ready(downstream_three_layer_classifier(x_big, params))
    ref_big = _reference(x_big, params)
    assert out_big.shape == (520, OUT), out_big.shape
    assert jnp.allclose(out_big, ref_big, atol=2e-2, rtol=2e-2), "mismatch (B=520)"

    print("KERNEL_OK")
</pallas_src>

<mosaic_0001>
module attributes {stable_mosaic.version = 11 : i64} {
  func.func @_mlp_kernel(%arg0: i32, %arg1: memref<8x1024xbf16, #tpu.memory_space<vmem>>, %arg2: memref<1024x128xbf16, #tpu.memory_space<vmem>>, %arg3: memref<1x128xf32, #tpu.memory_space<vmem>>, %arg4: memref<128x64xbf16, #tpu.memory_space<vmem>>, %arg5: memref<1x64xf32, #tpu.memory_space<vmem>>, %arg6: memref<64x128xbf16, #tpu.memory_space<vmem>>, %arg7: memref<1x128xf32, #tpu.memory_space<vmem>>, %arg8: memref<8x128xf32, #tpu.memory_space<vmem>>) attributes {dimension_semantics = [#tpu.dimension_semantics<parallel>], iteration_bounds = array<i64: 1>, scalar_prefetch = 0 : i64, scratch_operands = 0 : i64, tpu.core_type = #tpu.core_type<tc>, window_params = [{transform_indices = @transform_0, window_bounds = array<i64: 8, 1024>}, {pipeline_mode = #tpu.pipeline_mode<synchronous>, transform_indices = @transform_1, window_bounds = array<i64: 1024, 128>}, {pipeline_mode = #tpu.pipeline_mode<synchronous>, transform_indices = @transform_2, window_bounds = array<i64: 1, 128>}, {pipeline_mode = #tpu.pipeline_mode<synchronous>, transform_indices = @transform_3, window_bounds = array<i64: 128, 64>}, {pipeline_mode = #tpu.pipeline_mode<synchronous>, transform_indices = @transform_4, window_bounds = array<i64: 1, 64>}, {pipeline_mode = #tpu.pipeline_mode<synchronous>, transform_indices = @transform_5, window_bounds = array<i64: 64, 128>}, {pipeline_mode = #tpu.pipeline_mode<synchronous>, transform_indices = @transform_6, window_bounds = array<i64: 1, 128>}, {transform_indices = @transform_7, window_bounds = array<i64: 8, 128>}]} {
    %c0 = arith.constant 0 : index
    %c0_0 = arith.constant 0 : index
    %0 = vector.load %arg1[%c0, %c0_0] : memref<8x1024xbf16, #tpu.memory_space<vmem>>, vector<8x1024xbf16>
    %c0_1 = arith.constant 0 : index
    %c0_2 = arith.constant 0 : index
    %1 = vector.load %arg2[%c0_1, %c0_2] : memref<1024x128xbf16, #tpu.memory_space<vmem>>, vector<1024x128xbf16>
    %cst = arith.constant dense<0.000000e+00> : vector<8x128xf32>
    %2 = tpu.matmul %0, %1, %cst {dimension_numbers = #tpu.dot_dimension_numbers<[1], [0], [0], [1], [0, 0, 1, 1], [], []>} : vector<8x1024xbf16>, vector<1024x128xbf16>, vector<8x128xf32> -> vector<8x128xf32>
    %c0_3 = arith.constant 0 : index
    %c0_4 = arith.constant 0 : index
    %3 = vector.load %arg3[%c0_3, %c0_4] : memref<1x128xf32, #tpu.memory_space<vmem>>, vector<1x128xf32>
    %4 = vector.broadcast %3 : vector<1x128xf32> to vector<8x128xf32>
    %5 = arith.addf %2, %4 : vector<8x128xf32>
    %cst_5 = arith.constant 0.000000e+00 : f32
    %6 = vector.broadcast %cst_5 : f32 to vector<8x128xf32>
    %7 = arith.maximumf %5, %6 : vector<8x128xf32>
    %8 = arith.truncf %7 : vector<8x128xf32> to vector<8x128xbf16>
    %c0_6 = arith.constant 0 : index
    %c0_7 = arith.constant 0 : index
    %9 = vector.load %arg4[%c0_6, %c0_7] : memref<128x64xbf16, #tpu.memory_space<vmem>>, vector<128x64xbf16>
    %cst_8 = arith.constant dense<0.000000e+00> : vector<8x64xf32>
    %10 = tpu.matmul %8, %9, %cst_8 {dimension_numbers = #tpu.dot_dimension_numbers<[1], [0], [0], [1], [0, 0, 1, 1], [], []>} : vector<8x128xbf16>, vector<128x64xbf16>, vector<8x64xf32> -> vector<8x64xf32>
    %c0_9 = arith.constant 0 : index
    %c0_10 = arith.constant 0 : index
    %11 = vector.load %arg5[%c0_9, %c0_10] : memref<1x64xf32, #tpu.memory_space<vmem>>, vector<1x64xf32>
    %12 = vector.broadcast %11 : vector<1x64xf32> to vector<8x64xf32>
    %13 = arith.addf %10, %12 : vector<8x64xf32>
    %cst_11 = arith.constant 0.000000e+00 : f32
    %14 = vector.broadcast %cst_11 : f32 to vector<8x64xf32>
    %15 = arith.maximumf %13, %14 : vector<8x64xf32>
    %16 = arith.truncf %15 : vector<8x64xf32> to vector<8x64xbf16>
    %c0_12 = arith.constant 0 : index
    %c0_13 = arith.constant 0 : index
    %17 = vector.load %arg6[%c0_12, %c0_13] : memref<64x128xbf16, #tpu.memory_space<vmem>>, vector<64x128xbf16>
    %cst_14 = arith.constant dense<0.000000e+00> : vector<8x128xf32>
    %18 = tpu.matmul %16, %17, %cst_14 {dimension_numbers = #tpu.dot_dimension_numbers<[1], [0], [0], [1], [0, 0, 1, 1], [], []>} : vector<8x64xbf16>, vector<64x128xbf16>, vector<8x128xf32> -> vector<8x128xf32>
    %c0_15 = arith.constant 0 : index
    %c0_16 = arith.constant 0 : index
    %19 = vector.load %arg7[%c0_15, %c0_16] : memref<1x128xf32, #tpu.memory_space<vmem>>, vector<1x128xf32>
    %20 = vector.broadcast %19 : vector<1x128xf32> to vector<8x128xf32>
    %21 = arith.addf %18, %20 : vector<8x128xf32>
    %c0_17 = arith.constant 0 : index
    %c0_18 = arith.constant 0 : index
    %22 = vector.load %arg8[%c0_17, %c0_18] : memref<8x128xf32, #tpu.memory_space<vmem>>, vector<8x128xf32>
    tpu.vector_store %arg8[%c0_17, %c0_18], %21 {strides = array<i32>} : memref<8x128xf32, #tpu.memory_space<vmem>>, vector<8x128xf32>,
    return
  }
  func.func @transform_0(%arg0: i32) -> (i32, i32) {
    %c0_i32 = arith.constant 0 : i32
    %c0_i32_0 = arith.constant 0 : i32
    return %arg0, %c0_i32 : i32, i32
  }
  func.func @transform_1(%arg0: i32) -> (i32, i32) {
    %c0_i32 = arith.constant 0 : i32
    %c0_i32_0 = arith.constant 0 : i32
    %c0_i32_1 = arith.constant 0 : i32
    return %c0_i32, %c0_i32_0 : i32, i32
  }
  func.func @transform_2(%arg0: i32) -> (i32, i32) {
    %c0_i32 = arith.constant 0 : i32
    %c0_i32_0 = arith.constant 0 : i32
    %c0_i32_1 = arith.constant 0 : i32
    return %c0_i32, %c0_i32_0 : i32, i32
  }
  func.func @transform_3(%arg0: i32) -> (i32, i32) {
    %c0_i32 = arith.constant 0 : i32
    %c0_i32_0 = arith.constant 0 : i32
    %c0_i32_1 = arith.constant 0 : i32
    return %c0_i32, %c0_i32_0 : i32, i32
  }
  func.func @transform_4(%arg0: i32) -> (i32, i32) {
    %c0_i32 = arith.constant 0 : i32
    %c0_i32_0 = arith.constant 0 : i32
    %c0_i32_1 = arith.constant 0 : i32
    return %c0_i32, %c0_i32_0 : i32, i32
  }
  func.func @transform_5(%arg0: i32) -> (i32, i32) {
    %c0_i32 = arith.constant 0 : i32
    %c0_i32_0 = arith.constant 0 : i32
    %c0_i32_1 = arith.constant 0 : i32
    return %c0_i32, %c0_i32_0 : i32, i32
  }
  func.func @transform_6(%arg0: i32) -> (i32, i32) {
    %c0_i32 = arith.constant 0 : i32
    %c0_i32_0 = arith.constant 0 : i32
    %c0_i32_1 = arith.constant 0 : i32
    return %c0_i32, %c0_i32_0 : i32, i32
  }
  func.func @transform_7(%arg0: i32) -> (i32, i32) {
    %c0_i32 = arith.constant 0 : i32
    %c0_i32_0 = arith.constant 0 : i32
    return %arg0, %c0_i32 : i32, i32
  }
}

</mosaic_0001>

<llo_original>
// kernel: tpu_custom_call.1
$region0: #{tpu_custom_call.1}
  #allocation0 [shape = 'u32[]', space=smem, size = 0x4, offset = 0x4, fixed_abs, tag = 'smem constant byte address 0x4 - core index']
  #allocation1 [shape = 'u32[144,128]{1,0:T(1,128)}', space=vmem, size = 0x12000, scoped, tag = 'internal scratch']
  %s0 = inlined_call_operand.vmem [shape: bf16[8,1024], index: 0, kind: input, shape index: {}]
  %s1 = inlined_call_operand.hbm [shape: bf16[1024,128], index: 1, kind: input, shape index: {}]
  %s2 = inlined_call_operand.vmem [shape: f32[1,128], index: 2, kind: input, shape index: {}]
  %s3 = inlined_call_operand.vmem [shape: bf16[128,64], index: 3, kind: input, shape index: {}]
  %s4 = inlined_call_operand.vmem [shape: f32[1,64], index: 4, kind: input, shape index: {}]
  %s5 = inlined_call_operand.vmem [shape: bf16[64,128], index: 5, kind: input, shape index: {}]
  %s6 = inlined_call_operand.vmem [shape: f32[1,128], index: 6, kind: input, shape index: {}]
  %s7 = inlined_call_operand.hbm [shape: f32[8,128], index: 7, kind: output, shape index: {}]
  %s8 = sld [smem:[#allocation0]]
  $region42: #{tpu_custom_call.1} parent=0
    _
  %s10 = ssub.s32 1, %s8
  %s11 = scalar_select 0, %s10, %s8
  $region1: #{tpu_custom_call.1} parent=0
    #allocation2 [shape = 'u8[262144]{0}', space=vmem, size = 0x40000, scoped, tag = 'input window, operand 1, single buffered']
    #allocation3 [shape = 's32[1]{0}', space=sflag, size = 0x4, scoped, tag = 'scoped memory for tpu_custom_call.1']
    #allocation4 [shape = 's32[1]{0}', space=sflag, size = 0x4, scoped, tag = 'scoped memory for tpu_custom_call.1']
    #allocation5 [shape = 'u8[4096]{0}', space=vmem, size = 0x1000, scoped, tag = 'output window, operand 0, single buffered']
    %12 = vsyncpa [#allocation3], 0
    %13 = vsyncpa [#allocation4], 0
    // Predicated region
    $region2: #{tpu_custom_call.1} parent=1 // pred_check
      _
    $region3: #{tpu_custom_call.1} parent=1 // pred_check_branch
      %15 = sbr.rel (0) target = $region5
    $region4: #{tpu_custom_call.1} parent=1 // pred_region
      _
    $region5: #{tpu_custom_call.1} parent=1 // pred_fallthru
      _
    // Predicated region
    $region6: #{tpu_custom_call.1} parent=1 // pred_check
      _
    $region7: #{tpu_custom_call.1} parent=1 // pred_check_branch
      %17 = sbr.rel (0) target = $region9
    $region8: #{tpu_custom_call.1} parent=1 // pred_region
      %s19 = ssub.s32 8192, 8192
      %20 = vsyncadd [#allocation3], %s19
      %s21 = sshll.u32 [#allocation2], 4
      %s22 = int_to_ptr.vmem [resolvable:$true] %s21
      %27 = dma.hbm_to_vmem [thread:$0]  %s1, 8192, %s22, [#allocation3], 64, 64, 4
    $region9: #{tpu_custom_call.1} parent=1 // pred_fallthru
      _
    // Predicated region
    $region10: #{tpu_custom_call.1} parent=1 // pred_check
      _
    $region11: #{tpu_custom_call.1} parent=1 // pred_check_branch
      %29 = sbr.rel (0) target = $region13
    $region12: #{tpu_custom_call.1} parent=1 // pred_region
      _
    $region13: #{tpu_custom_call.1} parent=1 // pred_fallthru
      _
    // Predicated region
    $region14: #{tpu_custom_call.1} parent=1 // pred_check
      _
    $region15: #{tpu_custom_call.1} parent=1 // pred_check_branch
      %31 = sbr.rel (0) target = $region17
    $region16: #{tpu_custom_call.1} parent=1 // pred_region
      _
    $region17: #{tpu_custom_call.1} parent=1 // pred_fallthru
      _
    // Predicated region
    $region18: #{tpu_custom_call.1} parent=1 // pred_check
      _
    $region19: #{tpu_custom_call.1} parent=1 // pred_check_branch
      %33 = sbr.rel (0) target = $region21
    $region20: #{tpu_custom_call.1} parent=1 // pred_region
      _
    $region21: #{tpu_custom_call.1} parent=1 // pred_fallthru
      _
    // Predicated region
    $region22: #{tpu_custom_call.1} parent=1 // pred_check
      _
    $region23: #{tpu_custom_call.1} parent=1 // pred_check_branch
      %35 = sbr.rel (0) target = $region25
    $region24: #{tpu_custom_call.1} parent=1 // pred_region
      _
    $region25: #{tpu_custom_call.1} parent=1 // pred_fallthru
      _
    // Predicated region
    $region26: #{tpu_custom_call.1} parent=1 // pred_check
      _
    $region27: #{tpu_custom_call.1} parent=1 // pred_check_branch
      %37 = sbr.rel (0) target = $region29
    $region28: #{tpu_custom_call.1} parent=1 // pred_region
      _
    $region29: #{tpu_custom_call.1} parent=1 // pred_fallthru
      _
    // Predicated region
    $region30: #{tpu_custom_call.1} parent=1 // pred_check
      _
    $region31: #{tpu_custom_call.1} parent=1 // pred_check_branch
      %39 = sbr.rel (0) target = $region33
    $region32: #{tpu_custom_call.1} parent=1 // pred_region
      %40 = dma.done [#allocation3], 8192
    $region33: #{tpu_custom_call.1} parent=1 // pred_fallthru
      _
    %v42 = vld [vmem:[%s0] sm:$0xff]
    %v43 = vld [vmem:[%s0 + $0x8] sm:$0xff]
    %v44 = vld [vmem:[%s0 + $0x10] sm:$0xff]
    %v45 = vld [vmem:[%s0 + $0x18] sm:$0xff]
    %v46 = vld [vmem:[#allocation2] sm:$0xf]
    %v47 = vld [vmem:[#allocation2 + $0x4] sm:$0xf]
    %v48 = vld [vmem:[#allocation2 + $0x8] sm:$0xf]
    %v49 = vld [vmem:[#allocation2 + $0xc] sm:$0xf]
    %v50 = vld [vmem:[#allocation2 + $0x10] sm:$0xf]
    %v51 = vld [vmem:[#allocation2 + $0x14] sm:$0xf]
    %v52 = vld [vmem:[#allocation2 + $0x18] sm:$0xf]
    %v53 = vld [vmem:[#allocation2 + $0x1c] sm:$0xf]
    %v54 = vld [vmem:[#allocation2 + $0x20] sm:$0xf]
    %v55 = vld [vmem:[#allocation2 + $0x24] sm:$0xf]
    %v56 = vld [vmem:[#allocation2 + $0x28] sm:$0xf]
    %v57 = vld [vmem:[#allocation2 + $0x2c] sm:$0xf]
    %v58 = vld [vmem:[#allocation2 + $0x30] sm:$0xf]
    %v59 = vld [vmem:[#allocation2 + $0x34] sm:$0xf]
    %v60 = vld [vmem:[#allocation2 + $0x38] sm:$0xf]
    %v61 = vld [vmem:[#allocation2 + $0x3c] sm:$0xf]
    %v62 = vld [vmem:[#allocation2 + $0x40] sm:$0xf]
    %v63 = vld [vmem:[#allocation2 + $0x44] sm:$0xf]
    %v64 = vld [vmem:[#allocation2 + $0x48] sm:$0xf]
    %v65 = vld [vmem:[#allocation2 + $0x4c] sm:$0xf]
    %v66 = vld [vmem:[#allocation2 + $0x50] sm:$0xf]
    %v67 = vld [vmem:[#allocation2 + $0x54] sm:$0xf]
    %v68 = vld [vmem:[#allocation2 + $0x58] sm:$0xf]
    %v69 = vld [vmem:[#allocation2 + $0x5c] sm:$0xf]
    %v70 = vld [vmem:[#allocation2 + $0x60] sm:$0xf]
    %v71 = vld [vmem:[#allocation2 + $0x64] sm:$0xf]
    %v72 = vld [vmem:[#allocation2 + $0x68] sm:$0xf]
    %v73 = vld [vmem:[#allocation2 + $0x6c] sm:$0xf]
    %v74 = vld [vmem:[#allocation2 + $0x70] sm:$0xf]
    %v75 = vld [vmem:[#allocation2 + $0x74] sm:$0xf]
    %v76 = vld [vmem:[#allocation2 + $0x78] sm:$0xf]
    %v77 = vld [vmem:[#allocation2 + $0x7c] sm:$0xf]
    %v78 = vld [vmem:[#allocation2 + $0x80] sm:$0xf]
    %v79 = vld [vmem:[#allocation2 + $0x84] sm:$0xf]
    %v80 = vld [vmem:[#allocation2 + $0x88] sm:$0xf]
    %v81 = vld [vmem:[#allocation2 + $0x8c] sm:$0xf]
    %v82 = vld [vmem:[#allocation2 + $0x90] sm:$0xf]
    %v83 = vld [vmem:[#allocation2 + $0x94] sm:$0xf]
    %v84 = vld [vmem:[#allocation2 + $0x98] sm:$0xf]
    %v85 = vld [vmem:[#allocation2 + $0x9c] sm:$0xf]
    %v86 = vld [vmem:[#allocation2 + $0xa0] sm:$0xf]
    %v87 = vld [vmem:[#allocation2 + $0xa4] sm:$0xf]
    %v88 = vld [vmem:[#allocation2 + $0xa8] sm:$0xf]
    %v89 = vld [vmem:[#allocation2 + $0xac] sm:$0xf]
    %v90 = vld [vmem:[#allocation2 + $0xb0] sm:$0xf]
    %v91 = vld [vmem:[#allocation2 + $0xb4] sm:$0xf]
    %v92 = vld [vmem:[#allocation2 + $0xb8] sm:$0xf]
    %v93 = vld [vmem:[#allocation2 + $0xbc] sm:$0xf]
    %v94 = vld [vmem:[#allocation2 + $0xc0] sm:$0xf]
    %v95 = vld [vmem:[#allocation2 + $0xc4] sm:$0xf]
    %v96 = vld [vmem:[#allocation2 + $0xc8] sm:$0xf]
    %v97 = vld [vmem:[#allocation2 + $0xcc] sm:$0xf]
    %v98 = vld [vmem:[#allocation2 + $0xd0] sm:$0xf]
    %v99 = vld [vmem:[#allocation2 + $0xd4] sm:$0xf]
    %v100 = vld [vmem:[#allocation2 + $0xd8] sm:$0xf]
    %v101 = vld [vmem:[#allocation2 + $0xdc] sm:$0xf]
    %v102 = vld [vmem:[#allocation2 + $0xe0] sm:$0xf]
    %v103 = vld [vmem:[#allocation2 + $0xe4] sm:$0xf]
    %v104 = vld [vmem:[#allocation2 + $0xe8] sm:$0xf]
    %v105 = vld [vmem:[#allocation2 + $0xec] sm:$0xf]
    %v106 = vld [vmem:[#allocation2 + $0xf0] sm:$0xf]
    %v107 = vld [vmem:[#allocation2 + $0xf4] sm:$0xf]
    %v108 = vld [vmem:[#allocation2 + $0xf8] sm:$0xf]
    %v109 = vld [vmem:[#allocation2 + $0xfc] sm:$0xf]
    %v110 = vld [vmem:[#allocation2 + $0x100] sm:$0xf]
    %v111 = vld [vmem:[#allocation2 + $0x104] sm:$0xf]
    %v112 = vld [vmem:[#allocation2 + $0x108] sm:$0xf]
    %v113 = vld [vmem:[#allocation2 + $0x10c] sm:$0xf]
    %v114 = vld [vmem:[#allocation2 + $0x110] sm:$0xf]
    %v115 = vld [vmem:[#allocation2 + $0x114] sm:$0xf]
    %v116 = vld [vmem:[#allocation2 + $0x118] sm:$0xf]
    %v117 = vld [vmem:[#allocation2 + $0x11c] sm:$0xf]
    %v118 = vld [vmem:[#allocation2 + $0x120] sm:$0xf]
    %v119 = vld [vmem:[#allocation2 + $0x124] sm:$0xf]
    %v120 = vld [vmem:[#allocation2 + $0x128] sm:$0xf]
    %v121 = vld [vmem:[#allocation2 + $0x12c] sm:$0xf]
    %v122 = vld [vmem:[#allocation2 + $0x130] sm:$0xf]
    %v123 = vld [vmem:[#allocation2 + $0x134] sm:$0xf]
    %v124 = vld [vmem:[#allocation2 + $0x138] sm:$0xf]
    %v125 = vld [vmem:[#allocation2 + $0x13c] sm:$0xf]
    %v126 = vld [vmem:[#allocation2 + $0x140] sm:$0xf]
    %v127 = vld [vmem:[#allocation2 + $0x144] sm:$0xf]
    %v128 = vld [vmem:[#allocation2 + $0x148] sm:$0xf]
    %v129 = vld [vmem:[#allocation2 + $0x14c] sm:$0xf]
    %v130 = vld [vmem:[#allocation2 + $0x150] sm:$0xf]
    %v131 = vld [vmem:[#allocation2 + $0x154] sm:$0xf]
    %v132 = vld [vmem:[#allocation2 + $0x158] sm:$0xf]
    %v133 = vld [vmem:[#allocation2 + $0x15c] sm:$0xf]
    %v134 = vld [vmem:[#allocation2 + $0x160] sm:$0xf]
    %v135 = vld [vmem:[#allocation2 + $0x164] sm:$0xf]
    %v136 = vld [vmem:[#allocation2 + $0x168] sm:$0xf]
    %v137 = vld [vmem:[#allocation2 + $0x16c] sm:$0xf]
    %v138 = vld [vmem:[#allocation2 + $0x170] sm:$0xf]
    %v139 = vld [vmem:[#allocation2 + $0x174] sm:$0xf]
    %v140 = vld [vmem:[#allocation2 + $0x178] sm:$0xf]
    %v141 = vld [vmem:[#allocation2 + $0x17c] sm:$0xf]
    %v142 = vld [vmem:[#allocation2 + $0x180] sm:$0xf]
    %v143 = vld [vmem:[#allocation2 + $0x184] sm:$0xf]
    %v144 = vld [vmem:[#allocation2 + $0x188] sm:$0xf]
    %v145 = vld [vmem:[#allocation2 + $0x18c] sm:$0xf]
    %v146 = vld [vmem:[#allocation2 + $0x190] sm:$0xf]
    %v147 = vld [vmem:[#allocation2 + $0x194] sm:$0xf]
    %v148 = vld [vmem:[#allocation2 + $0x198] sm:$0xf]
    %v149 = vld [vmem:[#allocation2 + $0x19c] sm:$0xf]
    %v150 = vld [vmem:[#allocation2 + $0x1a0] sm:$0xf]
    %v151 = vld [vmem:[#allocation2 + $0x1a4] sm:$0xf]
    %v152 = vld [vmem:[#allocation2 + $0x1a8] sm:$0xf]
    %v153 = vld [vmem:[#allocation2 + $0x1ac] sm:$0xf]
    %v154 = vld [vmem:[#allocation2 + $0x1b0] sm:$0xf]
    %v155 = vld [vmem:[#allocation2 + $0x1b4] sm:$0xf]
    %v156 = vld [vmem:[#allocation2 + $0x1b8] sm:$0xf]
    %v157 = vld [vmem:[#allocation2 + $0x1bc] sm:$0xf]
    %v158 = vld [vmem:[#allocation2 + $0x1c0] sm:$0xf]
    %v159 = vld [vmem:[#allocation2 + $0x1c4] sm:$0xf]
    %v160 = vld [vmem:[#allocation2 + $0x1c8] sm:$0xf]
    %v161 = vld [vmem:[#allocation2 + $0x1cc] sm:$0xf]
    %v162 = vld [vmem:[#allocation2 + $0x1d0] sm:$0xf]
    %v163 = vld [vmem:[#allocation2 + $0x1d4] sm:$0xf]
    %v164 = vld [vmem:[#allocation2 + $0x1d8] sm:$0xf]
    %v165 = vld [vmem:[#allocation2 + $0x1dc] sm:$0xf]
    %v166 = vld [vmem:[#allocation2 + $0x1e0] sm:$0xf]
    %v167 = vld [vmem:[#allocation2 + $0x1e4] sm:$0xf]
    %v168 = vld [vmem:[#allocation2 + $0x1e8] sm:$0xf]
    %v169 = vld [vmem:[#allocation2 + $0x1ec] sm:$0xf]
    %v170 = vld [vmem:[#allocation2 + $0x1f0] sm:$0xf]
    %v171 = vld [vmem:[#allocation2 + $0x1f4] sm:$0xf]
    %v172 = vld [vmem:[#allocation2 + $0x1f8] sm:$0xf]
    %v173 = vld [vmem:[#allocation2 + $0x1fc] sm:$0xf]
    %v174 = vld [vmem:[%s2] sm:$0x1]
    %v176 = vlaneseq
    %v177 = vshrl.u32 %v176, 7
    %v178 = vsub.s32 0, %v177
    %v179 = vrot.slane %v174, %v178
    %v185 = vunpack.c.l.b16 %v42
    %v186 = vunpack.c.h.b16 %v42
    %v187 = vunpack.c.l.b16 %v43
    %v188 = vunpack.c.h.b16 %v43
    %v189 = vunpack.c.l.b16 %v44
    %v190 = vunpack.c.h.b16 %v44
    %v191 = vunpack.c.l.b16 %v45
    %v192 = vunpack.c.h.b16 %v45
    %v193 = vpack.c.b16 %v185, %v185
    %v194 = vpack.c.b16 %v186, %v186
    %v195 = vpack.c.b16 %v187, %v187
    %v196 = vpack.c.b16 %v188, %v188
    %v197 = vpack.c.b16 %v189, %v189
    %v198 = vpack.c.b16 %v190, %v190
    %v199 = vpack.c.b16 %v191, %v191
    %v200 = vpack.c.b16 %v192, %v192
    %v337 = vunpack.c.l.b16 %v46
    %v338 = vunpack.c.l.b16 %v47
    %v339 = vunpack.c.l.b16 %v48
    %v340 = vunpack.c.l.b16 %v49
    %v341 = vunpack.c.l.b16 %v50
    %v342 = vunpack.c.l.b16 %v51
    %v343 = vunpack.c.l.b16 %v52
    %v344 = vunpack.c.l.b16 %v53
    %v345 = vunpack.c.l.b16 %v54
    %v346 = vunpack.c.l.b16 %v55
    %v347 = vunpack.c.l.b16 %v56
    %v348 = vunpack.c.l.b16 %v57
    %v349 = vunpack.c.l.b16 %v58
    %v350 = vunpack.c.l.b16 %v59
    %v351 = vunpack.c.l.b16 %v60
    %v352 = vunpack.c.l.b16 %v61
    %v353 = vunpack.c.l.b16 %v62
    %v354 = vunpack.c.l.b16 %v63
    %v355 = vunpack.c.l.b16 %v64
    %v356 = vunpack.c.l.b16 %v65
    %v357 = vunpack.c.l.b16 %v66
    %v358 = vunpack.c.l.b16 %v67
    %v359 = vunpack.c.l.b16 %v68
    %v360 = vunpack.c.l.b16 %v69
    %v361 = vunpack.c.l.b16 %v70
    %v362 = vunpack.c.l.b16 %v71
    %v363 = vunpack.c.l.b16 %v72
    %v364 = vunpack.c.l.b16 %v73
    %v365 = vunpack.c.l.b16 %v74
    %v366 = vunpack.c.l.b16 %v75
    %v367 = vunpack.c.l.b16 %v76
    %v368 = vunpack.c.l.b16 %v77
    %v369 = vunpack.c.l.b16 %v78
    %v370 = vunpack.c.l.b16 %v79
    %v371 = vunpack.c.l.b16 %v80
    %v372 = vunpack.c.l.b16 %v81
    %v373 = vunpack.c.l.b16 %v82
    %v374 = vunpack.c.l.b16 %v83
    %v375 = vunpack.c.l.b16 %v84
    %v376 = vunpack.c.l.b16 %v85
    %v377 = vunpack.c.l.b16 %v86
    %v378 = vunpack.c.l.b16 %v87
    %v379 = vunpack.c.l.b16 %v88
    %v380 = vunpack.c.l.b16 %v89
    %v381 = vunpack.c.l.b16 %v90
    %v382 = vunpack.c.l.b16 %v91
    %v383 = vunpack.c.l.b16 %v92
    %v384 = vunpack.c.l.b16 %v93
    %v385 = vunpack.c.l.b16 %v94
    %v386 = vunpack.c.l.b16 %v95
    %v387 = vunpack.c.l.b16 %v96
    %v388 = vunpack.c.l.b16 %v97
    %v389 = vunpack.c.l.b16 %v98
    %v390 = vunpack.c.l.b16 %v99
    %v391 = vunpack.c.l.b16 %v100
    %v392 = vunpack.c.l.b16 %v101
    %v393 = vunpack.c.l.b16 %v102
    %v394 = vunpack.c.l.b16 %v103
    %v395 = vunpack.c.l.b16 %v104
    %v396 = vunpack.c.l.b16 %v105
    %v397 = vunpack.c.l.b16 %v106
    %v398 = vunpack.c.l.b16 %v107
    %v399 = vunpack.c.l.b16 %v108
    %v400 = vunpack.c.l.b16 %v109
    %v401 = vunpack.c.l.b16 %v110
    %v402 = vunpack.c.l.b16 %v111
    %v403 = vunpack.c.l.b16 %v112
    %v404 = vunpack.c.l.b16 %v113
    %v405 = vunpack.c.l.b16 %v114
    %v406 = vunpack.c.l.b16 %v115
    %v407 = vunpack.c.l.b16 %v116
    %v408 = vunpack.c.l.b16 %v117
    %v409 = vunpack.c.l.b16 %v118
    %v410 = vunpack.c.l.b16 %v119
    %v411 = vunpack.c.l.b16 %v120
    %v412 = vunpack.c.l.b16 %v121
    %v413 = vunpack.c.l.b16 %v122
    %v414 = vunpack.c.l.b16 %v123
    %v415 = vunpack.c.l.b16 %v124
    %v416 = vunpack.c.l.b16 %v125
    %v417 = vunpack.c.l.b16 %v126
    %v418 = vunpack.c.l.b16 %v127
    %v419 = vunpack.c.l.b16 %v128
    %v420 = vunpack.c.l.b16 %v129
    %v421 = vunpack.c.l.b16 %v130
    %v422 = vunpack.c.l.b16 %v131
    %v423 = vunpack.c.l.b16 %v132
    %v424 = vunpack.c.l.b16 %v133
    %v425 = vunpack.c.l.b16 %v134
    %v426 = vunpack.c.l.b16 %v135
    %v427 = vunpack.c.l.b16 %v136
    %v428 = vunpack.c.l.b16 %v137
    %v429 = vunpack.c.l.b16 %v138
    %v430 = vunpack.c.l.b16 %v139
    %v431 = vunpack.c.l.b16 %v140
    %v432 = vunpack.c.l.b16 %v141
    %v433 = vunpack.c.l.b16 %v142
    %v434 = vunpack.c.l.b16 %v143
    %v435 = vunpack.c.l.b16 %v144
    %v436 = vunpack.c.l.b16 %v145
    %v437 = vunpack.c.l.b16 %v146
    %v438 = vunpack.c.l.b16 %v147
    %v439 = vunpack.c.l.b16 %v148
    %v440 = vunpack.c.l.b16 %v149
    %v441 = vunpack.c.l.b16 %v150
    %v442 = vunpack.c.l.b16 %v151
    %v443 = vunpack.c.l.b16 %v152
    %v444 = vunpack.c.l.b16 %v153
    %v445 = vunpack.c.l.b16 %v154
    %v446 = vunpack.c.l.b16 %v155
    %v447 = vunpack.c.l.b16 %v156
    %v448 = vunpack.c.l.b16 %v157
    %v449 = vunpack.c.l.b16 %v158
    %v450 = vunpack.c.l.b16 %v159
    %v451 = vunpack.c.l.b16 %v160
    %v452 = vunpack.c.l.b16 %v161
    %v453 = vunpack.c.l.b16 %v162
    %v454 = vunpack.c.l.b16 %v163
    %v455 = vunpack.c.l.b16 %v164
    %v456 = vunpack.c.l.b16 %v165
    %v457 = vunpack.c.l.b16 %v166
    %v458 = vunpack.c.l.b16 %v167
    %v459 = vunpack.c.l.b16 %v168
    %v460 = vunpack.c.l.b16 %v169
    %v461 = vunpack.c.l.b16 %v170
    %v462 = vunpack.c.l.b16 %v171
    %v463 = vunpack.c.l.b16 %v172
    %v464 = vunpack.c.l.b16 %v173
    %v465 = vpack.c.b16 %v338, %v337
    %v466 = vpack.c.b16 %v340, %v339
    %v467 = vpack.c.b16 %v342, %v341
    %v468 = vpack.c.b16 %v344, %v343
    %v469 = vpack.c.b16 %v346, %v345
    %v470 = vpack.c.b16 %v348, %v347
    %v471 = vpack.c.b16 %v350, %v349
    %v472 = vpack.c.b16 %v352, %v351
    %v473 = vpack.c.b16 %v354, %v353
    %v474 = vpack.c.b16 %v356, %v355
    %v475 = vpack.c.b16 %v358, %v357
    %v476 = vpack.c.b16 %v360, %v359
    %v477 = vpack.c.b16 %v362, %v361
    %v478 = vpack.c.b16 %v364, %v363
    %v479 = vpack.c.b16 %v366, %v365
    %v480 = vpack.c.b16 %v368, %v367
    %v481 = vpack.c.b16 %v370, %v369
    %v482 = vpack.c.b16 %v372, %v371
    %v483 = vpack.c.b16 %v374, %v373
    %v484 = vpack.c.b16 %v376, %v375
    %v485 = vpack.c.b16 %v378, %v377
    %v486 = vpack.c.b16 %v380, %v379
    %v487 = vpack.c.b16 %v382, %v381
    %v488 = vpack.c.b16 %v384, %v383
    %v489 = vpack.c.b16 %v386, %v385
    %v490 = vpack.c.b16 %v388, %v387
    %v491 = vpack.c.b16 %v390, %v389
    %v492 = vpack.c.b16 %v392, %v391
    %v493 = vpack.c.b16 %v394, %v393
    %v494 = vpack.c.b16 %v396, %v395
    %v495 = vpack.c.b16 %v398, %v397
    %v496 = vpack.c.b16 %v400, %v399
    %v497 = vpack.c.b16 %v402, %v401
    %v498 = vpack.c.b16 %v404, %v403
    %v499 = vpack.c.b16 %v406, %v405
    %v500 = vpack.c.b16 %v408, %v407
    %v501 = vpack.c.b16 %v410, %v409
    %v502 = vpack.c.b16 %v412, %v411
    %v503 = vpack.c.b16 %v414, %v413
    %v504 = vpack.c.b16 %v416, %v415
    %v505 = vpack.c.b16 %v418, %v417
    %v506 = vpack.c.b16 %v420, %v419
    %v507 = vpack.c.b16 %v422, %v421
    %v508 = vpack.c.b16 %v424, %v423
    %v509 = vpack.c.b16 %v426, %v425
    %v510 = vpack.c.b16 %v428, %v427
    %v511 = vpack.c.b16 %v430, %v429
    %v512 = vpack.c.b16 %v432, %v431
    %v513 = vpack.c.b16 %v434, %v433
    %v514 = vpack.c.b16 %v436, %v435
    %v515 = vpack.c.b16 %v438, %v437
    %v516 = vpack.c.b16 %v440, %v439
    %v517 = vpack.c.b16 %v442, %v441
    %v518 = vpack.c.b16 %v444, %v443
    %v519 = vpack.c.b16 %v446, %v445
    %v520 = vpack.c.b16 %v448, %v447
    %v521 = vpack.c.b16 %v450, %v449
    %v522 = vpack.c.b16 %v452, %v451
    %v523 = vpack.c.b16 %v454, %v453
    %v524 = vpack.c.b16 %v456, %v455
    %v525 = vpack.c.b16 %v458, %v457
    %v526 = vpack.c.b16 %v460, %v459
    %v527 = vpack.c.b16 %v462, %v461
    %v528 = vpack.c.b16 %v464, %v463
    %593 = vmatprep.subr.bf16.mxu0 0
    %594 = vmatpush1.bf16.msra.mxu0 %v465
    %595 = vmatprep.subr.bf16.mxu0 0
    %596 = vmatpush1.bf16.msra.mxu0 %v466
    %597 = vmatprep.subr.bf16.mxu0 0
    %598 = vmatpush1.bf16.msra.mxu0 %v467
    %599 = vmatprep.subr.bf16.mxu0 0
    %600 = vmatpush1.bf16.msra.mxu0 %v468
    %601 = vmatprep.subr.bf16.mxu0 0
    %602 = vmatpush1.bf16.msra.mxu0 %v469
    %603 = vmatprep.subr.bf16.mxu0 0
    %604 = vmatpush1.bf16.msra.mxu0 %v470
    %605 = vmatprep.subr.bf16.mxu0 0
    %606 = vmatpush1.bf16.msra.mxu0 %v471
    %607 = vmatprep.subr.bf16.mxu0 0
    %608 = vmatpush1.bf16.msra.mxu0 %v472
    %609 = vmatprep.subr.bf16.mxu0 0
    %610 = vmatpush1.bf16.msra.mxu0 %v473
    %611 = vmatprep.subr.bf16.mxu0 0
    %612 = vmatpush1.bf16.msra.mxu0 %v474
    %613 = vmatprep.subr.bf16.mxu0 0
    %614 = vmatpush1.bf16.msra.mxu0 %v475
    %615 = vmatprep.subr.bf16.mxu0 0
    %616 = vmatpush1.bf16.msra.mxu0 %v476
    %617 = vmatprep.subr.bf16.mxu0 0
    %618 = vmatpush1.bf16.msra.mxu0 %v477
    %619 = vmatprep.subr.bf16.mxu0 0
    %620 = vmatpush1.bf16.msra.mxu0 %v478
    %621 = vmatprep.subr.bf16.mxu0 0
    %622 = vmatpush1.bf16.msra.mxu0 %v479
    %623 = vmatprep.subr.bf16.mxu0 0
    %624 = vmatpush1.bf16.msra.mxu0 %v480
    %625 = vmatprep.mubr.bf16.mxu0 %v194
    %626 = vmatmul.mubr.bf16.gmra.mrb[0].mxu0 %v193
    %v627 = vpop.f32.mrb[0].mxu0
    %v628 = vadd.f32 %v179, %v627
    %v629 = vpop.f32.mrb[0].mxu0
    %v630 = vpop.f32.mrb[0].mxu0
    %v631 = vpop.f32.mrb[0].mxu0
    %632 = vdwg.mxu0
    %633 = vmatprep.subr.bf16.mxu0 0
    %634 = vmatpush1.bf16.msra.mxu0 %v481
    %635 = vmatprep.subr.bf16.mxu0 0
    %636 = vmatpush1.bf16.msra.mxu0 %v482
    %637 = vmatprep.subr.bf16.mxu0 0
    %638 = vmatpush1.bf16.msra.mxu0 %v483
    %639 = vmatprep.subr.bf16.mxu0 0
    %640 = vmatpush1.bf16.msra.mxu0 %v484
    %641 = vmatprep.subr.bf16.mxu0 0
    %642 = vmatpush1.bf16.msra.mxu0 %v485
    %643 = vmatprep.subr.bf16.mxu0 0
    %644 = vmatpush1.bf16.msra.mxu0 %v486
    %645 = vmatprep.subr.bf16.mxu0 0
    %646 = vmatpush1.bf16.msra.mxu0 %v487
    %647 = vmatprep.subr.bf16.mxu0 0
    %648 = vmatpush1.bf16.msra.mxu0 %v488
    %649 = vmatprep.subr.bf16.mxu0 0
    %650 = vmatpush1.bf16.msra.mxu0 %v489
    %651 = vmatprep.subr.bf16.mxu0 0
    %652 = vmatpush1.bf16.msra.mxu0 %v490
    %653 = vmatprep.subr.bf16.mxu0 0
    %654 = vmatpush1.bf16.msra.mxu0 %v491
    %655 = vmatprep.subr.bf16.mxu0 0
    %656 = vmatpush1.bf16.msra.mxu0 %v492
    %657 = vmatprep.subr.bf16.mxu0 0
    %658 = vmatpush1.bf16.msra.mxu0 %v493
    %659 = vmatprep.subr.bf16.mxu0 0
    %660 = vmatpush1.bf16.msra.mxu0 %v494
    %661 = vmatprep.subr.bf16.mxu0 0
    %662 = vmatpush1.bf16.msra.mxu0 %v495
    %663 = vmatprep.subr.bf16.mxu0 0
    %664 = vmatpush1.bf16.msra.mxu0 %v496
    %665 = vmatprep.mubr.bf16.mxu0 %v196
    %666 = vmatmul.mubr.bf16.gmra.mrb[0].mxu0 %v195
    %v667 = vpop.f32.mrb[0].mxu0
    %v668 = vadd.f32 %v628, %v667
    %v669 = vpop.f32.mrb[0].mxu0
    %v670 = vpop.f32.mrb[0].mxu0
    %v671 = vpop.f32.mrb[0].mxu0
    %672 = vdwg.mxu0
    %673 = vmatprep.subr.bf16.mxu0 0
    %674 = vmatpush1.bf16.msra.mxu0 %v497
    %675 = vmatprep.subr.bf16.mxu0 0
    %676 = vmatpush1.bf16.msra.mxu0 %v498
    %677 = vmatprep.subr.bf16.mxu0 0
    %678 = vmatpush1.bf16.msra.mxu0 %v499
    %679 = vmatprep.subr.bf16.mxu0 0
    %680 = vmatpush1.bf16.msra.mxu0 %v500
    %681 = vmatprep.subr.bf16.mxu0 0
    %682 = vmatpush1.bf16.msra.mxu0 %v501
    %683 = vmatprep.subr.bf16.mxu0 0
    %684 = vmatpush1.bf16.msra.mxu0 %v502
    %685 = vmatprep.subr.bf16.mxu0 0
    %686 = vmatpush1.bf16.msra.mxu0 %v503
    %687 = vmatprep.subr.bf16.mxu0 0
    %688 = vmatpush1.bf16.msra.mxu0 %v504
    %689 = vmatprep.subr.bf16.mxu0 0
    %690 = vmatpush1.bf16.msra.mxu0 %v505
    %691 = vmatprep.subr.bf16.mxu0 0
    %692 = vmatpush1.bf16.msra.mxu0 %v506
    %693 = vmatprep.subr.bf16.mxu0 0
    %694 = vmatpush1.bf16.msra.mxu0 %v507
    %695 = vmatprep.subr.bf16.mxu0 0
    %696 = vmatpush1.bf16.msra.mxu0 %v508
    %697 = vmatprep.subr.bf16.mxu0 0
    %698 = vmatpush1.bf16.msra.mxu0 %v509
    %699 = vmatprep.subr.bf16.mxu0 0
    %700 = vmatpush1.bf16.msra.mxu0 %v510
    %701 = vmatprep.subr.bf16.mxu0 0
    %702 = vmatpush1.bf16.msra.mxu0 %v511
    %703 = vmatprep.subr.bf16.mxu0 0
    %704 = vmatpush1.bf16.msra.mxu0 %v512
    %705 = vmatprep.mubr.bf16.mxu0 %v198
    %706 = vmatmul.mubr.bf16.gmra.mrb[0].mxu0 %v197
    %v707 = vpop.f32.mrb[0].mxu0
    %v708 = vadd.f32 %v668, %v707
    %v709 = vpop.f32.mrb[0].mxu0
    %v710 = vpop.f32.mrb[0].mxu0
    %v711 = vpop.f32.mrb[0].mxu0
    %712 = vdwg.mxu0
    %713 = vmatprep.subr.bf16.mxu0 0
    %714 = vmatpush1.bf16.msra.mxu0 %v513
    %715 = vmatprep.subr.bf16.mxu0 0
    %716 = vmatpush1.bf16.msra.mxu0 %v514
    %717 = vmatprep.subr.bf16.mxu0 0
    %718 = vmatpush1.bf16.msra.mxu0 %v515
    %719 = vmatprep.subr.bf16.mxu0 0
    %720 = vmatpush1.bf16.msra.mxu0 %v516
    %721 = vmatprep.subr.bf16.mxu0 0
    %722 = vmatpush1.bf16.msra.mxu0 %v517
    %723 = vmatprep.subr.bf16.mxu0 0
    %724 = vmatpush1.bf16.msra.mxu0 %v518
    %725 = vmatprep.subr.bf16.mxu0 0
    %726 = vmatpush1.bf16.msra.mxu0 %v519
    %727 = vmatprep.subr.bf16.mxu0 0
    %728 = vmatpush1.bf16.msra.mxu0 %v520
    %729 = vmatprep.subr.bf16.mxu0 0
    %730 = vmatpush1.bf16.msra.mxu0 %v521
    %731 = vmatprep.subr.bf16.mxu0 0
    %732 = vmatpush1.bf16.msra.mxu0 %v522
    %733 = vmatprep.subr.bf16.mxu0 0
    %734 = vmatpush1.bf16.msra.mxu0 %v523
    %735 = vmatprep.subr.bf16.mxu0 0
    %736 = vmatpush1.bf16.msra.mxu0 %v524
    %737 = vmatprep.subr.bf16.mxu0 0
    %738 = vmatpush1.bf16.msra.mxu0 %v525
    %739 = vmatprep.subr.bf16.mxu0 0
    %740 = vmatpush1.bf16.msra.mxu0 %v526
    %741 = vmatprep.subr.bf16.mxu0 0
    %742 = vmatpush1.bf16.msra.mxu0 %v527
    %743 = vmatprep.subr.bf16.mxu0 0
    %744 = vmatpush1.bf16.msra.mxu0 %v528
    %745 = vmatprep.mubr.bf16.mxu0 %v200
    %746 = vmatmul.mubr.bf16.gmra.mrb[0].mxu0 %v199
    %v747 = vpop.f32.mrb[0].mxu0
    %v748 = vadd.f32 %v708, %v747
    %v749 = vpop.f32.mrb[0].mxu0
    %v750 = vpop.f32.mrb[0].mxu0
    %v751 = vpop.f32.mrb[0].mxu0
    %752 = vdwg.mxu0
    %v753 = vmax.f32 %v748, 0.0
    %v754 = vpack.c.bf16 %v753, %v753
    %v755 = vld [vmem:[%s3] sm:$0xf]
    %v756 = vld [vmem:[%s3 + $0x4] sm:$0xf]
    %v757 = vld [vmem:[%s3 + $0x8] sm:$0xf]
    %v758 = vld [vmem:[%s3 + $0xc] sm:$0xf]
    %v759 = vld [vmem:[%s3 + $0x10] sm:$0xf]
    %v760 = vld [vmem:[%s3 + $0x14] sm:$0xf]
    %v761 = vld [vmem:[%s3 + $0x18] sm:$0xf]
    %v762 = vld [vmem:[%s3 + $0x1c] sm:$0xf]
    %v763 = vld [vmem:[%s3 + $0x20] sm:$0xf]
    %v764 = vld [vmem:[%s3 + $0x24] sm:$0xf]
    %v765 = vld [vmem:[%s3 + $0x28] sm:$0xf]
    %v766 = vld [vmem:[%s3 + $0x2c] sm:$0xf]
    %v767 = vld [vmem:[%s3 + $0x30] sm:$0xf]
    %v768 = vld [vmem:[%s3 + $0x34] sm:$0xf]
    %v769 = vld [vmem:[%s3 + $0x38] sm:$0xf]
    %v770 = vld [vmem:[%s3 + $0x3c] sm:$0xf]
    %v771 = vld [vmem:[%s4] sm:$0x1]
    %v773 = vlaneseq
    %v774 = vshrl.u32 %v773, 7
    %v775 = vsub.s32 0, %v774
    %v776 = vrot.slane %v771, %v775
    %v794 = vunpack.c.l.b16 %v755
    %v795 = vunpack.c.l.b16 %v756
    %v796 = vunpack.c.l.b16 %v757
    %v797 = vunpack.c.l.b16 %v758
    %v798 = vunpack.c.l.b16 %v759
    %v799 = vunpack.c.l.b16 %v760
    %v800 = vunpack.c.l.b16 %v761
    %v801 = vunpack.c.l.b16 %v762
    %v802 = vunpack.c.l.b16 %v763
    %v803 = vunpack.c.l.b16 %v764
    %v804 = vunpack.c.l.b16 %v765
    %v805 = vunpack.c.l.b16 %v766
    %v806 = vunpack.c.l.b16 %v767
    %v807 = vunpack.c.l.b16 %v768
    %v808 = vunpack.c.l.b16 %v769
    %v809 = vunpack.c.l.b16 %v770
    %v810 = vpack.c.b16 %v795, %v794
    %v811 = vpack.c.b16 %v797, %v796
    %v812 = vpack.c.b16 %v799, %v798
    %v813 = vpack.c.b16 %v801, %v800
    %v814 = vpack.c.b16 %v803, %v802
    %v815 = vpack.c.b16 %v805, %v804
    %v816 = vpack.c.b16 %v807, %v806
    %v817 = vpack.c.b16 %v809, %v808
    %826 = vmatprep.subr.bf16.mxu0 0
    %827 = vmatpush1.bf16.msra.mxu0 %v810
    %828 = vmatprep.subr.bf16.mxu0 0
    %829 = vmatpush1.bf16.msra.mxu0 %v811
    %830 = vmatprep.subr.bf16.mxu0 0
    %831 = vmatpush1.bf16.msra.mxu0 %v812
    %832 = vmatprep.subr.bf16.mxu0 0
    %833 = vmatpush1.bf16.msra.mxu0 %v813
    %834 = vmatprep.subr.bf16.mxu0 0
    %835 = vmatpush1.bf16.msra.mxu0 %v814
    %836 = vmatprep.subr.bf16.mxu0 0
    %837 = vmatpush1.bf16.msra.mxu0 %v815
    %838 = vmatprep.subr.bf16.mxu0 0
    %839 = vmatpush1.bf16.msra.mxu0 %v816
    %840 = vmatprep.subr.bf16.mxu0 0
    %841 = vmatpush1.bf16.msra.mxu0 %v817
    %842 = vmatprep.subr.bf16.mxu0 0
    %843 = vmatpush1.bf16.msra.mxu0 0
    %844 = vmatprep.subr.bf16.mxu0 0
    %845 = vmatpush1.bf16.msra.mxu0 0
    %846 = vmatprep.subr.bf16.mxu0 0
    %847 = vmatpush1.bf16.msra.mxu0 0
    %848 = vmatprep.subr.bf16.mxu0 0
    %849 = vmatpush1.bf16.msra.mxu0 0
    %850 = vmatprep.subr.bf16.mxu0 0
    %851 = vmatpush1.bf16.msra.mxu0 0
    %852 = vmatprep.subr.bf16.mxu0 0
    %853 = vmatpush1.bf16.msra.mxu0 0
    %854 = vmatprep.subr.bf16.mxu0 0
    %855 = vmatpush1.bf16.msra.mxu0 0
    %856 = vmatprep.subr.bf16.mxu0 0
    %857 = vmatpush1.bf16.msra.mxu0 0
    %858 = vmatprep.mubr.bf16.mxu0 0
    %859 = vmatmul.mubr.bf16.gmra.mrb[0].mxu0 %v754
    %v860 = vpop.f32.mrb[0].mxu0
    %v861 = vadd.f32 %v776, %v860
    %v862 = vpop.f32.mrb[0].mxu0
    %v863 = vpop.f32.mrb[0].mxu0
    %v864 = vpop.f32.mrb[0].mxu0
    %865 = vdwg.mxu0
    %v866 = vmax.f32 %v861, 0.0
    %v867 = vpack.c.bf16 %v866, %v866
    %v868 = vld [vmem:[%s5] sm:$0xf]
    %v869 = vld [vmem:[%s5 + $0x4] sm:$0xf]
    %v870 = vld [vmem:[%s5 + $0x8] sm:$0xf]
    %v871 = vld [vmem:[%s5 + $0xc] sm:$0xf]
    %v872 = vld [vmem:[%s5 + $0x10] sm:$0xf]
    %v873 = vld [vmem:[%s5 + $0x14] sm:$0xf]
    %v874 = vld [vmem:[%s5 + $0x18] sm:$0xf]
    %v875 = vld [vmem:[%s5 + $0x1c] sm:$0xf]
    %v876 = vld [vmem:[%s6] sm:$0x1]
    %v878 = vlaneseq
    %v879 = vshrl.u32 %v878, 7
    %v880 = vsub.s32 0, %v879
    %v881 = vrot.slane %v876, %v880
    %v891 = vunpack.c.l.b16 %v868
    %v892 = vunpack.c.l.b16 %v869
    %v893 = vunpack.c.l.b16 %v870
    %v894 = vunpack.c.l.b16 %v871
    %v895 = vunpack.c.l.b16 %v872
    %v896 = vunpack.c.l.b16 %v873
    %v897 = vunpack.c.l.b16 %v874
    %v898 = vunpack.c.l.b16 %v875
    %v899 = vpack.c.b16 %v892, %v891
    %v900 = vpack.c.b16 %v894, %v893
    %v901 = vpack.c.b16 %v896, %v895
    %v902 = vpack.c.b16 %v898, %v897
    %vm907 = vcmask 523264
    %v909 = vsel %vm907, %v867, 0
    %911 = vmatprep.subr.bf16.mxu0 0
    %912 = vmatpush1.bf16.msra.mxu0 %v899
    %913 = vmatprep.subr.bf16.mxu0 0
    %914 = vmatpush1.bf16.msra.mxu0 %v900
    %915 = vmatprep.subr.bf16.mxu0 0
    %916 = vmatpush1.bf16.msra.mxu0 %v901
    %917 = vmatprep.subr.bf16.mxu0 0
    %918 = vmatpush1.bf16.msra.mxu0 %v902
    %919 = vmatprep.subr.bf16.mxu0 0
    %920 = vmatpush1.bf16.msra.mxu0 0
    %921 = vmatprep.subr.bf16.mxu0 0
    %922 = vmatpush1.bf16.msra.mxu0 0
    %923 = vmatprep.subr.bf16.mxu0 0
    %924 = vmatpush1.bf16.msra.mxu0 0
    %925 = vmatprep.subr.bf16.mxu0 0
    %926 = vmatpush1.bf16.msra.mxu0 0
    %927 = vmatprep.subr.bf16.mxu0 0
    %928 = vmatpush1.bf16.msra.mxu0 0
    %929 = vmatprep.subr.bf16.mxu0 0
    %930 = vmatpush1.bf16.msra.mxu0 0
    %931 = vmatprep.subr.bf16.mxu0 0
    %932 = vmatpush1.bf16.msra.mxu0 0
    %933 = vmatprep.subr.bf16.mxu0 0
    %934 = vmatpush1.bf16.msra.mxu0 0
    %935 = vmatprep.subr.bf16.mxu0 0
    %936 = vmatpush1.bf16.msra.mxu0 0
    %937 = vmatprep.subr.bf16.mxu0 0
    %938 = vmatpush1.bf16.msra.mxu0 0
    %939 = vmatprep.subr.bf16.mxu0 0
    %940 = vmatpush1.bf16.msra.mxu0 0
    %941 = vmatprep.subr.bf16.mxu0 0
    %942 = vmatpush1.bf16.msra.mxu0 0
    %943 = vmatprep.mubr.bf16.mxu0 0
    %944 = vmatmul.mubr.bf16.gmra.mrb[0].mxu0 %v909
    %v945 = vpop.f32.mrb[0].mxu0
    %v946 = vadd.f32 %v881, %v945
    %v947 = vpop.f32.mrb[0].mxu0
    %v948 = vpop.f32.mrb[0].mxu0
    %v949 = vpop.f32.mrb[0].mxu0
    %950 = vdwg.mxu0
    %951 = vst [vmem:[#allocation5] sm:$0xff] %v946
    // Predicated region
    $region34: #{tpu_custom_call.1} parent=1 // pred_check
      _
    $region35: #{tpu_custom_call.1} parent=1 // pred_check_branch
      %953 = sbr.rel (0) target = $region37
    $region36: #{tpu_custom_call.1} parent=1 // pred_region
      %s955 = ssub.s32 128, 128
      %956 = vsyncadd [#allocation4], %s955
      %s958 = sshll.u32 [#allocation5], 4
      %s959 = int_to_ptr.vmem [resolvable:$true] %s958
      %961 = dma.vmem_to_hbm [thread:$0]  %s959, 128, %s7, [#allocation4]
    $region37: #{tpu_custom_call.1} parent=1 // pred_fallthru
      _
    // Predicated region
    $region38: #{tpu_custom_call.1} parent=1 // pred_check
      _
    $region39: #{tpu_custom_call.1} parent=1 // pred_check_branch
      %963 = sbr.rel (0) target = $region41
    $region40: #{tpu_custom_call.1} parent=1 // pred_region
      %964 = dma.done [#allocation4], 128
    $region41: #{tpu_custom_call.1} parent=1 // pred_fallthru
      _
    %965 = vsyncpa [#allocation3], 1
    %966 = vsyncpa [#allocation4], 1

</llo_original>
